<compile_context>
chip_gen: v7x
topology: tpu7x:2x2x1
jax: 0.10.0
libtpu: 0.0.40
codegen_flags: <defaults>
</compile_context>

<pallas_src>
import jax
import jax.numpy as jnp
from jax import lax
from jax.experimental import pallas as pl
from jax.experimental.pallas import tpu as pltpu


def _ffn_kernel(x_ref, w1_ref, b1_ref, w2_ref, b2_ref, o_ref):
    # x_ref : (Nb, C, Lt)   activation tile, channels on sublanes, L on lanes
    # w1_ref: (H, C)        lin1.weight (VMEM-resident, constant index_map)
    # b1_ref: (H, 1)        lin1.bias   (f32)
    # w2_ref: (C, H)        lin2.weight (VMEM-resident)
    # b2_ref: (C, 1)        lin2.bias   (f32)
    # o_ref : (Nb, C, Lt)
    w1 = w1_ref[...]
    w2 = w2_ref[...]
    b1 = b1_ref[...]
    b2 = b2_ref[...]
    nb = x_ref.shape[0]

    def one_batch(b):
        x = x_ref[b]                                                   # (C, Lt)
        h = jnp.dot(w1, x, preferred_element_type=jnp.float32) + b1    # (H, Lt) f32
        h = jnp.maximum(h, 0.0)                                        # ReLU, stays in VMEM
        # TODO(synk): nn.Dropout is stochastic in training mode; this is the
        # eval/inference forward (identity), matching deterministic deployment.
        h = h.astype(w2.dtype)
        o = jnp.dot(w2, h, preferred_element_type=jnp.float32) + b2    # (C, Lt) f32
        o_ref[b] = o.astype(o_ref.dtype)

    if nb <= 8:
        for b in range(nb):          # unrolled: LLO scheduler sees the whole body
            one_batch(b)
    else:
        lax.fori_loop(0, nb, lambda b, c: (one_batch(b), c)[1], 0)


def _choose_tiles(N, C, L, H, act_bytes, w_bytes, vmem_budget=28 * 1024 * 1024):
    """Pick (Nb, l_tile, padded_L) so double-buffered in/out tiles + resident
    weights + the f32 hidden working set stay under `vmem_budget`."""
    lp = ((L + 127) // 128) * 128                      # lane-dense padded length

    # Fixed VMEM: both weights + (lane-padded) biases, double-buffered.
    fixed = 2 * 2 * H * C * w_bytes + 2 * 2 * (H + C) * 128 * 4
    avail = max(vmem_budget - fixed, 1 << 20)

    # Per-lane bytes with Nb=1: streamed in+out tiles (double-buffered) plus the
    # f32 hidden / pre-cast f32 output working set.
    per_lane = 4 * C * act_bytes + 8 * H + 4 * C
    l_cap = max(128, (avail // per_lane) // 128 * 128)

    # Prefer the largest multiple-of-128 divisor of lp that fits the cap; fall
    # back to a capped non-divisor tile (with extra padding) only if the best
    # divisor is a poor fit.
    best_div = 128
    t = 128
    while t <= min(lp, l_cap):
        if lp % t == 0:
            best_div = t
        t += 128
    capped = min(lp, l_cap)
    if best_div * 2 >= capped:
        l_tile = best_div
    else:
        l_tile = capped
        lp = ((lp + l_tile - 1) // l_tile) * l_tile
    l_steps = lp // l_tile

    # Grow the batch block while staying under budget and (when possible)
    # keeping >= 2 grid steps so both v7x TensorCores get work.
    def footprint(nb):
        return fixed + (4 * C * act_bytes) * nb * l_tile + (8 * H + 4 * C) * l_tile

    nb = 1
    max_steps = N * l_steps
    for cand in range(N, 0, -1):
        if N % cand:
            continue
        steps = (N // cand) * l_steps
        if footprint(cand) <= vmem_budget and (steps >= 2 or max_steps < 2):
            nb = cand
            break
    return nb, l_tile, lp


def feedforward_ncl(x, w1, b1, w2, b2):
    """x: (N, C, L); w1: (H, C); b1: (H,); w2: (C, H); b2: (C,) -> (N, C, L)."""
    N, C, L = x.shape
    H = w1.shape[0]
    act_bytes = x.dtype.itemsize
    w_bytes = w1.dtype.itemsize

    nb, l_tile, lp = _choose_tiles(N, C, L, H, act_bytes, w_bytes)
    # TODO(synk): if H*C weights ever exceed the VMEM budget (tens of MiB),
    # tile H with an inner "arbitrary" grid axis + f32 accumulator scratch.

    xp = x if lp == L else jnp.pad(x, ((0, 0), (0, 0), (0, lp - L)))
    b1c = b1.reshape(H, 1).astype(jnp.float32)
    b2c = b2.reshape(C, 1).astype(jnp.float32)

    grid = (N // nb, lp // l_tile)

    flops = 4 * N * C * H * lp                        # two C x H matmuls per L element
    bytes_accessed = 2 * N * C * lp * act_bytes + 2 * H * C * w_bytes + (H + C) * 4
    cost = pl.CostEstimate(flops=flops, bytes_accessed=bytes_accessed,
                           transcendentals=0)

    out = pl.pallas_call(
        _ffn_kernel,
        out_shape=jax.ShapeDtypeStruct((N, C, lp), x.dtype),
        grid=grid,
        in_specs=[
            pl.BlockSpec((nb, C, l_tile), lambda b, l: (b, 0, l)),   # activations
            pl.BlockSpec((H, C), lambda b, l: (0, 0)),               # W1 (resident)
            pl.BlockSpec((H, 1), lambda b, l: (0, 0)),               # b1 (resident)
            pl.BlockSpec((C, H), lambda b, l: (0, 0)),               # W2 (resident)
            pl.BlockSpec((C, 1), lambda b, l: (0, 0)),               # b2 (resident)
        ],
        out_specs=pl.BlockSpec((nb, C, l_tile), lambda b, l: (b, 0, l)),
        compiler_params=pltpu.CompilerParams(
            dimension_semantics=("parallel", "parallel"),
            vmem_limit_bytes=48 * 1024 * 1024),
        cost_estimate=cost,
    )(xp, w1, b1c, w2, b2c)

    return out if lp == L else out[:, :, :L]


class FeedForwardPallas:
    """Pallas equivalent of the PyTorch FeedForward module (eval-mode forward)."""

    def __init__(self, io_size, drop_rate, hidden_size=128, *, key):
        self.io_size = io_size
        self.hidden_size = hidden_size
        self.drop_rate = drop_rate  # unused in eval-mode forward
        k1, k2, k3, k4 = jax.random.split(key, 4)
        # torch nn.Linear init: U(-1/sqrt(fan_in), 1/sqrt(fan_in)) for weight & bias.
        b1_bound = 1.0 / (io_size ** 0.5)
        b2_bound = 1.0 / (hidden_size ** 0.5)
        self.w1 = jax.random.uniform(k1, (hidden_size, io_size),
                                     minval=-b1_bound, maxval=b1_bound,
                                     dtype=jnp.float32)
        self.b1 = jax.random.uniform(k2, (hidden_size,),
                                     minval=-b1_bound, maxval=b1_bound,
                                     dtype=jnp.float32)
        self.w2 = jax.random.uniform(k3, (io_size, hidden_size),
                                     minval=-b2_bound, maxval=b2_bound,
                                     dtype=jnp.float32)
        self.b2 = jax.random.uniform(k4, (io_size,),
                                     minval=-b2_bound, maxval=b2_bound,
                                     dtype=jnp.float32)

    def __call__(self, x):
        # x: (N, io_size, L) -> (N, io_size, L)
        return feedforward_ncl(x, self.w1, self.b1, self.w2, self.b2)


def _reference(x, w1, b1, w2, b2):
    xt = jnp.transpose(x, (0, 2, 1))                   # (N, L, C)
    h = jnp.maximum(jnp.einsum("nlc,hc->nlh", xt, w1) + b1, 0.0)
    o = jnp.einsum("nlh,ch->nlc", h, w2) + b2
    return jnp.transpose(o, (0, 2, 1))                 # (N, C, L)


if __name__ == "__main__":
    key = jax.random.PRNGKey(0)
    kx, kp = jax.random.split(key)

    N, io_size, L = 2, 4, 16
    hidden_size, drop_rate = 32, 0.1

    x = jax.random.normal(kx, (N, io_size, L), dtype=jnp.float32)
    mod = FeedForwardPallas(io_size, drop_rate, hidden_size, key=kp)

    out = jax.block_until_ready(mod(x))

    assert out.shape == (N, io_size, L)
    ref = _reference(x, mod.w1, mod.b1, mod.w2, mod.b2)
    assert jnp.allclose(out, ref, atol=1e-5, rtol=1e-5)
    print("KERNEL_OK")
</pallas_src>

<mosaic_0001>
module attributes {stable_mosaic.version = 11 : i64} {
  func.func @_ffn_kernel(%arg0: i32, %arg1: i32, %arg2: memref<1x4x128xf32, #tpu.memory_space<vmem>>, %arg3: memref<32x4xf32, #tpu.memory_space<vmem>>, %arg4: memref<32x1xf32, #tpu.memory_space<vmem>>, %arg5: memref<4x32xf32, #tpu.memory_space<vmem>>, %arg6: memref<4x1xf32, #tpu.memory_space<vmem>>, %arg7: memref<1x4x128xf32, #tpu.memory_space<vmem>>) attributes {dimension_semantics = [#tpu.dimension_semantics<parallel>, #tpu.dimension_semantics<parallel>], iteration_bounds = array<i64: 2, 1>, scalar_prefetch = 0 : i64, scratch_operands = 0 : i64, tpu.core_type = #tpu.core_type<tc>, window_params = [{transform_indices = @transform_0, window_bounds = array<i64: 1, 4, 128>}, {pipeline_mode = #tpu.pipeline_mode<synchronous>, transform_indices = @transform_1, window_bounds = array<i64: 32, 4>}, {pipeline_mode = #tpu.pipeline_mode<synchronous>, transform_indices = @transform_2, window_bounds = array<i64: 32, 1>}, {pipeline_mode = #tpu.pipeline_mode<synchronous>, transform_indices = @transform_3, window_bounds = array<i64: 4, 32>}, {pipeline_mode = #tpu.pipeline_mode<synchronous>, transform_indices = @transform_4, window_bounds = array<i64: 4, 1>}, {transform_indices = @transform_5, window_bounds = array<i64: 1, 4, 128>}]} {
    %c0 = arith.constant 0 : index
    %c0_0 = arith.constant 0 : index
    %0 = vector.load %arg3[%c0, %c0_0] : memref<32x4xf32, #tpu.memory_space<vmem>>, vector<32x4xf32>
    %c0_1 = arith.constant 0 : index
    %c0_2 = arith.constant 0 : index
    %1 = vector.load %arg5[%c0_1, %c0_2] : memref<4x32xf32, #tpu.memory_space<vmem>>, vector<4x32xf32>
    %c0_3 = arith.constant 0 : index
    %c0_4 = arith.constant 0 : index
    %2 = vector.load %arg4[%c0_3, %c0_4] : memref<32x1xf32, #tpu.memory_space<vmem>>, vector<32x1xf32>
    %c0_5 = arith.constant 0 : index
    %c0_6 = arith.constant 0 : index
    %3 = vector.load %arg6[%c0_5, %c0_6] : memref<4x1xf32, #tpu.memory_space<vmem>>, vector<4x1xf32>
    %c0_7 = arith.constant 0 : index
    %c0_8 = arith.constant 0 : index
    %c0_9 = arith.constant 0 : index
    %4 = vector.load %arg2[%c0_7, %c0_8, %c0_9] : memref<1x4x128xf32, #tpu.memory_space<vmem>>, vector<1x4x128xf32>
    %5 = vector.shape_cast %4 : vector<1x4x128xf32> to vector<4x128xf32>
    %cst = arith.constant dense<0.000000e+00> : vector<32x128xf32>
    %6 = tpu.matmul %0, %5, %cst {dimension_numbers = #tpu.dot_dimension_numbers<[1], [0], [0], [1], [0, 0, 1, 1], [], []>} : vector<32x4xf32>, vector<4x128xf32>, vector<32x128xf32> -> vector<32x128xf32>
    %7 = vector.broadcast %2 : vector<32x1xf32> to vector<32x128xf32>
    %8 = arith.addf %6, %7 : vector<32x128xf32>
    %cst_10 = arith.constant 0.000000e+00 : f32
    %9 = vector.broadcast %cst_10 : f32 to vector<32x128xf32>
    %10 = arith.maximumf %8, %9 : vector<32x128xf32>
    %cst_11 = arith.constant dense<0.000000e+00> : vector<4x128xf32>
    %11 = tpu.matmul %1, %10, %cst_11 {dimension_numbers = #tpu.dot_dimension_numbers<[1], [0], [0], [1], [0, 0, 1, 1], [], []>} : vector<4x32xf32>, vector<32x128xf32>, vector<4x128xf32> -> vector<4x128xf32>
    %12 = vector.broadcast %3 : vector<4x1xf32> to vector<4x128xf32>
    %13 = arith.addf %11, %12 : vector<4x128xf32>
    %c0_12 = arith.constant 0 : index
    %c0_13 = arith.constant 0 : index
    %c0_14 = arith.constant 0 : index
    %14 = vector.load %arg7[%c0_12, %c0_13, %c0_14] : memref<1x4x128xf32, #tpu.memory_space<vmem>>, vector<1x4x128xf32>
    %15 = vector.shape_cast %14 : vector<1x4x128xf32> to vector<4x128xf32>
    %16 = vector.shape_cast %13 : vector<4x128xf32> to vector<1x4x128xf32>
    tpu.vector_store %arg7[%c0_12, %c0_13, %c0_14], %16 {strides = array<i32>} : memref<1x4x128xf32, #tpu.memory_space<vmem>>, vector<1x4x128xf32>,
    return
  }
  func.func @transform_0(%arg0: i32, %arg1: i32) -> (i32, i32, i32) {
    %c0_i32 = arith.constant 0 : i32
    %c0_i32_0 = arith.constant 0 : i32
    return %arg0, %c0_i32, %arg1 : i32, i32, i32
  }
  func.func @transform_1(%arg0: i32, %arg1: i32) -> (i32, i32) {
    %c0_i32 = arith.constant 0 : i32
    %c0_i32_0 = arith.constant 0 : i32
    %c0_i32_1 = arith.constant 0 : i32
    return %c0_i32, %c0_i32_0 : i32, i32
  }
  func.func @transform_2(%arg0: i32, %arg1: i32) -> (i32, i32) {
    %c0_i32 = arith.constant 0 : i32
    %c0_i32_0 = arith.constant 0 : i32
    %c0_i32_1 = arith.constant 0 : i32
    return %c0_i32, %c0_i32_0 : i32, i32
  }
  func.func @transform_3(%arg0: i32, %arg1: i32) -> (i32, i32) {
    %c0_i32 = arith.constant 0 : i32
    %c0_i32_0 = arith.constant 0 : i32
    %c0_i32_1 = arith.constant 0 : i32
    return %c0_i32, %c0_i32_0 : i32, i32
  }
  func.func @transform_4(%arg0: i32, %arg1: i32) -> (i32, i32) {
    %c0_i32 = arith.constant 0 : i32
    %c0_i32_0 = arith.constant 0 : i32
    %c0_i32_1 = arith.constant 0 : i32
    return %c0_i32, %c0_i32_0 : i32, i32
  }
  func.func @transform_5(%arg0: i32, %arg1: i32) -> (i32, i32, i32) {
    %c0_i32 = arith.constant 0 : i32
    %c0_i32_0 = arith.constant 0 : i32
    return %arg0, %c0_i32, %arg1 : i32, i32, i32
  }
}

</mosaic_0001>

<llo_original>
// kernel: tpu_custom_call.1
$region0: #{tpu_custom_call.1}
  #allocation0 [shape = 'u32[]', space=smem, size = 0x4, offset = 0x4, fixed_abs, tag = 'smem constant byte address 0x4 - core index']
  #allocation1 [shape = 'u32[144,128]{1,0:T(1,128)}', space=vmem, size = 0x12000, scoped, tag = 'internal scratch']
  %s0 = inlined_call_operand.vmem [shape: f32[2,4,128], index: 0, kind: input, shape index: {}]
  %s1 = inlined_call_operand.vmem [shape: f32[32,4], index: 1, kind: input, shape index: {}]
  %s2 = inlined_call_operand.vmem [shape: f32[32,1], index: 2, kind: input, shape index: {}]
  %s3 = inlined_call_operand.vmem [shape: f32[4,32], index: 3, kind: input, shape index: {}]
  %s4 = inlined_call_operand.vmem [shape: f32[4,1], index: 4, kind: input, shape index: {}]
  %s5 = inlined_call_operand.hbm [shape: f32[2,4,128], index: 5, kind: output, shape index: {}]
  %s6 = sld [smem:[#allocation0]]
  $region53: #{tpu_custom_call.1} parent=0
    _
  %s8 = ssub.s32 1, %s6
  %s9 = scalar_select 0, %s8, %s6
  $region1: #{tpu_custom_call.1} parent=0
    #allocation2 [shape = 'u8[4096]{0}', space=vmem, size = 0x1000, scoped, tag = 'output window, operand 0']
    #allocation3 [shape = 's32[2]{0}', space=sflag, size = 0x8, scoped, tag = 'scoped memory for tpu_custom_call.1']
    %10 = vsyncpa [#allocation3], 0
    %s11 = scalar_lea.sflag [#allocation3], 1
    %12 = vsyncpa %s11, 0
    loop: start=0, step=1, limit=4
    $region2: #{tpu_custom_call.1} parent=1 // loop_pre_header
      _
    $region3: #{tpu_custom_call.1} parent=1 // loop_header
      %s14 = sphi 0, %s18
      %p15 = scmp.ge.s32.totalorder %s14, 4
      %s21 = sphi 0, %s33
      %s22 = sphi 0, %s29
      %s23 = sphi 0, %s21
      %s24 = sphi 0, %s22
      %s25 = sphi 0, %s23
      %s26 = sphi 0, %s24
      %s38 = sphi 0, %s40
      %s41 = sphi 0, %s38
      %s42 = sphi 0, %s41
      %s58 = sphi 0, %s42
      %s62 = sphi 0, %s62
      %s64 = sphi 0, %s62
      %s65 = sphi 0, %s64
      %s79 = sphi 0, %s65
      %s83 = sphi 0, %s83
      %s85 = sphi 0, %s83
      %s86 = sphi 0, %s85
      %s100 = sphi 0, %s86
      %s104 = sphi 0, %s104
      %s106 = sphi 0, %s104
      %s107 = sphi 0, %s106
      %s121 = sphi 0, %s107
      %s125 = sphi 0, %s125
      %s127 = sphi 0, %s125
      %s128 = sphi 0, %s127
      %s142 = sphi 0, %s128
      %s150 = sphi 0, %s152
      %s153 = sphi 0, %s150
      %s154 = sphi 0, %s153
      %s170 = sphi 0, %s154
    $region4: #{tpu_custom_call.1} parent=1 // loop_header_branch
      %17 = sbr.rel (%p15) target = $region8
    $region5: #{tpu_custom_call.1} parent=1 // loop_body
      %s19 = ssub.s32 %s14, 1
      %s20 = ssub.s32 %s14, 2
      %s27 = sadd.s32 1, %s22
      %p28 = scmp.ge.s32.totalorder %s27, 1
      %s29 = scalar_select %p28, 0, %s27
      %s30 = sadd.s32 1, %s21
      %s31 = scalar_select %p28, %s30, %s21
      %p32 = scmp.ge.s32.totalorder %s31, 2
      %s33 = scalar_select %p32, 0, %s31
      %s34 = ssub.s32 %s21, %s33
      %s35 = ssub.s32 %s22, %s29
      %s36 = sor.u32 %s34, %s35
      %p37 = scmp.eq.s32.totalorder %s36, 0
      %s39 = sadd.s32 %s38, 1
      %s40 = scalar_select %p37, %s38, %s39
      %p43 = pneg %p37
      %p44 = scmp.eq.s32.totalorder %s14, 1
      %p45 = por %p43, %p44
      %p46 = scmp.ne.s32.totalorder %s38, %s41
      %p47 = scmp.eq.s32.totalorder %s14, 0
      %p48 = por %p46, %p47
      %p49 = scmp.ne.s32.totalorder %s38, %s41
      %p50 = scmp.eq.s32.totalorder %s19, 1
      %p51 = por %p49, %p50
      %p52 = scmp.ne.s32.totalorder %s41, %s42
      %p53 = scmp.eq.s32.totalorder %s19, 0
      %p54 = por %p52, %p53
      %p55 = scmp.ne.s32.totalorder %s41, %s42
      %p56 = scmp.eq.s32.totalorder %s20, 1
      %p57 = por %p55, %p56
      %p59 = scmp.ne.s32.totalorder %s42, %s58
      %p60 = scmp.eq.s32.totalorder %s20, 0
      %p61 = por %p59, %p60
      %s63 = sadd.s32 %s62, 1
      %p66 = scmp.eq.s32.totalorder %s14, 1
      %p67 = scmp.ne.s32.totalorder %s62, %s64
      %p68 = scmp.eq.s32.totalorder %s14, 0
      %p69 = por %p67, %p68
      %p70 = scmp.ne.s32.totalorder %s62, %s64
      %p71 = scmp.eq.s32.totalorder %s19, 1
      %p72 = por %p70, %p71
      %p73 = scmp.ne.s32.totalorder %s64, %s65
      %p74 = scmp.eq.s32.totalorder %s19, 0
      %p75 = por %p73, %p74
      %p76 = scmp.ne.s32.totalorder %s64, %s65
      %p77 = scmp.eq.s32.totalorder %s20, 1
      %p78 = por %p76, %p77
      %p80 = scmp.ne.s32.totalorder %s65, %s79
      %p81 = scmp.eq.s32.totalorder %s20, 0
      %p82 = por %p80, %p81
      %s84 = sadd.s32 %s83, 1
      %p87 = scmp.eq.s32.totalorder %s14, 1
      %p88 = scmp.ne.s32.totalorder %s83, %s85
      %p89 = scmp.eq.s32.totalorder %s14, 0
      %p90 = por %p88, %p89
      %p91 = scmp.ne.s32.totalorder %s83, %s85
      %p92 = scmp.eq.s32.totalorder %s19, 1
      %p93 = por %p91, %p92
      %p94 = scmp.ne.s32.totalorder %s85, %s86
      %p95 = scmp.eq.s32.totalorder %s19, 0
      %p96 = por %p94, %p95
      %p97 = scmp.ne.s32.totalorder %s85, %s86
      %p98 = scmp.eq.s32.totalorder %s20, 1
      %p99 = por %p97, %p98
      %p101 = scmp.ne.s32.totalorder %s86, %s100
      %p102 = scmp.eq.s32.totalorder %s20, 0
      %p103 = por %p101, %p102
      %s105 = sadd.s32 %s104, 1
      %p108 = scmp.eq.s32.totalorder %s14, 1
      %p109 = scmp.ne.s32.totalorder %s104, %s106
      %p110 = scmp.eq.s32.totalorder %s14, 0
      %p111 = por %p109, %p110
      %p112 = scmp.ne.s32.totalorder %s104, %s106
      %p113 = scmp.eq.s32.totalorder %s19, 1
      %p114 = por %p112, %p113
      %p115 = scmp.ne.s32.totalorder %s106, %s107
      %p116 = scmp.eq.s32.totalorder %s19, 0
      %p117 = por %p115, %p116
      %p118 = scmp.ne.s32.totalorder %s106, %s107
      %p119 = scmp.eq.s32.totalorder %s20, 1
      %p120 = por %p118, %p119
      %p122 = scmp.ne.s32.totalorder %s107, %s121
      %p123 = scmp.eq.s32.totalorder %s20, 0
      %p124 = por %p122, %p123
      %s126 = sadd.s32 %s125, 1
      %p129 = scmp.eq.s32.totalorder %s14, 1
      %p130 = scmp.ne.s32.totalorder %s125, %s127
      %p131 = scmp.eq.s32.totalorder %s14, 0
      %p132 = por %p130, %p131
      %p133 = scmp.ne.s32.totalorder %s125, %s127
      %p134 = scmp.eq.s32.totalorder %s19, 1
      %p135 = por %p133, %p134
      %p136 = scmp.ne.s32.totalorder %s127, %s128
      %p137 = scmp.eq.s32.totalorder %s19, 0
      %p138 = por %p136, %p137
      %p139 = scmp.ne.s32.totalorder %s127, %s128
      %p140 = scmp.eq.s32.totalorder %s20, 1
      %p141 = por %p139, %p140
      %p143 = scmp.ne.s32.totalorder %s128, %s142
      %p144 = scmp.eq.s32.totalorder %s20, 0
      %p145 = por %p143, %p144
      %s146 = ssub.s32 %s21, %s33
      %s147 = ssub.s32 %s22, %s29
      %s148 = sor.u32 %s146, %s147
      %p149 = scmp.eq.s32.totalorder %s148, 0
      %s151 = sadd.s32 %s150, 1
      %s152 = scalar_select %p149, %s150, %s151
      %p155 = pneg %p149
      %p156 = scmp.eq.s32.totalorder %s14, 1
      %p157 = por %p155, %p156
      %p158 = scmp.ne.s32.totalorder %s150, %s153
      %p159 = scmp.eq.s32.totalorder %s14, 0
      %p160 = por %p158, %p159
      %p161 = scmp.ne.s32.totalorder %s150, %s153
      %p162 = scmp.eq.s32.totalorder %s19, 1
      %p163 = por %p161, %p162
      %p164 = scmp.ne.s32.totalorder %s153, %s154
      %p165 = scmp.eq.s32.totalorder %s19, 0
      %p166 = por %p164, %p165
      %p167 = scmp.ne.s32.totalorder %s153, %s154
      %p168 = scmp.eq.s32.totalorder %s20, 1
      %p169 = por %p167, %p168
      %p171 = scmp.ne.s32.totalorder %s154, %s170
      %p172 = scmp.eq.s32.totalorder %s20, 0
      %p173 = por %p171, %p172
      %p174 = scmp.le.s32.totalorder 1, %s14
      %p175 = scmp.lt.s32.totalorder %s14, 3
      %p176 = pnand %p174, %p175
      %p177 = pneg %p176
      // Predicated region
      $region9: #{tpu_custom_call.1} parent=5 // pred_check
        _
      $region10: #{tpu_custom_call.1} parent=5 // pred_check_branch
        %179 = sbr.rel (%p176) target = $region12
      $region11: #{tpu_custom_call.1} parent=5 // pred_region
        %s180 = ssub.s32 %s14, 1
        // Predicated region
        $region13: #{tpu_custom_call.1} parent=11 // pred_check
          %p181 = pneg %p75
        $region14: #{tpu_custom_call.1} parent=11 // pred_check_branch
          %183 = sbr.rel (%p181) target = $region16
        $region15: #{tpu_custom_call.1} parent=11 // pred_region
          _
        $region16: #{tpu_custom_call.1} parent=11 // pred_fallthru
          _
        // Predicated region
        $region17: #{tpu_custom_call.1} parent=11 // pred_check
          %p184 = pneg %p96
        $region18: #{tpu_custom_call.1} parent=11 // pred_check_branch
          %186 = sbr.rel (%p184) target = $region20
        $region19: #{tpu_custom_call.1} parent=11 // pred_region
          _
        $region20: #{tpu_custom_call.1} parent=11 // pred_fallthru
          _
        // Predicated region
        $region21: #{tpu_custom_call.1} parent=11 // pred_check
          %p187 = pneg %p117
        $region22: #{tpu_custom_call.1} parent=11 // pred_check_branch
          %189 = sbr.rel (%p187) target = $region24
        $region23: #{tpu_custom_call.1} parent=11 // pred_region
          _
        $region24: #{tpu_custom_call.1} parent=11 // pred_fallthru
          _
        // Predicated region
        $region25: #{tpu_custom_call.1} parent=11 // pred_check
          %p190 = pneg %p138
        $region26: #{tpu_custom_call.1} parent=11 // pred_check_branch
          %192 = sbr.rel (%p190) target = $region28
        $region27: #{tpu_custom_call.1} parent=11 // pred_region
          _
        $region28: #{tpu_custom_call.1} parent=11 // pred_fallthru
          _
      $region12: #{tpu_custom_call.1} parent=5 // pred_fallthru
        _
      %p193 = scmp.lt.s32.totalorder %s14, 2
      // Predicated region
      $region29: #{tpu_custom_call.1} parent=5 // pred_check
        %p194 = pneg %p193
      $region30: #{tpu_custom_call.1} parent=5 // pred_check_branch
        %196 = sbr.rel (%p194) target = $region32
      $region31: #{tpu_custom_call.1} parent=5 // pred_region
        // Predicated region
        $region33: #{tpu_custom_call.1} parent=31 // pred_check
          %p197 = pneg %p48
        $region34: #{tpu_custom_call.1} parent=31 // pred_check_branch
          %199 = sbr.rel (%p197) target = $region36
        $region35: #{tpu_custom_call.1} parent=31 // pred_region
          %p200 = scmp.lt.s32.totalorder %s21, 1
          %s201 = scalar_select %p200, %s21, 1
          %p202 = scmp.lt.s32.totalorder %s22, 0
          %s203 = scalar_select %p202, %s22, 0
          %s204 = sadd.s32 %s203, %s201
          %s205 = smul.addr %s204, 4
          %s206 = scalar_lea.vmem %s0, %s205
        $region36: #{tpu_custom_call.1} parent=31 // pred_fallthru
          _
      $region32: #{tpu_custom_call.1} parent=5 // pred_fallthru
        _
      %p207 = scmp.le.s32.totalorder 1, %s14
      %p208 = scmp.lt.s32.totalorder %s14, 3
      %p209 = pnand %p207, %p208
      %p210 = pneg %p209
      // Predicated region
      $region37: #{tpu_custom_call.1} parent=5 // pred_check
        _
      $region38: #{tpu_custom_call.1} parent=5 // pred_check_branch
        %212 = sbr.rel (%p209) target = $region40
      $region39: #{tpu_custom_call.1} parent=5 // pred_region
        %s213 = ssub.s32 %s14, 1
        %p214 = scmp.lt.s32.totalorder %s23, 1
        %s215 = scalar_select %p214, %s23, 1
        %p216 = scmp.lt.s32.totalorder %s24, 0
        %s217 = scalar_select %p216, %s24, 0
        %s218 = sadd.s32 %s217, %s215
        %s219 = smul.addr %s218, 4
        %s220 = scalar_lea.vmem %s0, %s219
        %p221 = pneg %p54
        %p222 = pneg %p51
        %p223 = pneg %p75
        %p224 = pneg %p72
        %p225 = pneg %p96
        %p226 = pneg %p93
        %p227 = pneg %p117
        %p228 = pneg %p114
        %p229 = pneg %p138
        %p230 = pneg %p135
        %p231 = pneg %p166
        %p232 = pneg %p163
        %s233 = sand.u32 %s153, 1
        %s234 = scalar_lea.sflag [#allocation3], %s233
        %s235 = sand.u32 %s153, 1
        %s236 = smul.addr %s235, 4
        %s237 = scalar_lea.vmem [#allocation2], %s236
        %p238 = scmp.lt.s32.totalorder %s23, 1
        %s239 = scalar_select %p238, %s23, 1
        %p240 = scmp.lt.s32.totalorder %s24, 0
        %s241 = scalar_select %p240, %s24, 0
        %s242 = sadd.s32 %s241, %s239
        %s243 = smul.addr %s242, 4
        %s244 = scalar_lea.vmem %s0, %s243
        %v245 = vld [vmem:[%s1] sm:$0xff]
        %v246 = vld [vmem:[%s1 + $0x8] sm:$0xff]
        %v247 = vld [vmem:[%s1 + $0x10] sm:$0xff]
        %v248 = vld [vmem:[%s1 + $0x18] sm:$0xff]
        %v249 = vld [vmem:[%s3] sm:$0xf]
        %v250 = vld [vmem:[%s2] sm:$0xff]
        %v251 = vld [vmem:[%s2 + $0x8] sm:$0xff]
        %v252 = vld [vmem:[%s2 + $0x10] sm:$0xff]
        %v253 = vld [vmem:[%s2 + $0x18] sm:$0xff]
        %v254 = vld [vmem:[%s4] sm:$0xf]
        %v255 = vld [vmem:[%s244] sm:$0xf]
        %257 = vset.pattern.permute.xlu0 0
        %258 = vperm.xlu0 %257, %v250
        %v259 = vpop.permute.xlu0 %258
        %262 = vset.pattern.permute.xlu0 0
        %263 = vperm.xlu0 %262, %v251
        %v264 = vpop.permute.xlu0 %263
        %267 = vset.pattern.permute.xlu0 0
        %268 = vperm.xlu0 %267, %v252
        %v269 = vpop.permute.xlu0 %268
        %272 = vset.pattern.permute.xlu0 0
        %273 = vperm.xlu0 %272, %v253
        %v274 = vpop.permute.xlu0 %273
        %vm276 = vcmask 31744
        %v278 = vsel %vm276, %v245, 0
        %v281 = vsel %vm276, %v246, 0
        %v284 = vsel %vm276, %v247, 0
        %v287 = vsel %vm276, %v248, 0
        %vm289 = vcmask 1043456
        %v291 = vsel %vm289, %v255, 0
        %293 = vmatprep.subr.mxu0 0.0
        %294 = vmatpush1.msra.mxu0 %v291
        %295 = vmatprep.subr.mxu0 0.0
        %296 = vmatpush1.msra.mxu0 0.0
        %297 = vmatprep.subr.mxu0 0.0
        %298 = vmatpush1.msra.mxu0 0.0
        %299 = vmatprep.subr.mxu0 0.0
        %300 = vmatpush1.msra.mxu0 0.0
        %301 = vmatprep.subr.mxu0 0.0
        %302 = vmatpush1.msra.mxu0 0.0
        %303 = vmatprep.subr.mxu0 0.0
        %304 = vmatpush1.msra.mxu0 0.0
        %305 = vmatprep.subr.mxu0 0.0
        %306 = vmatpush1.msra.mxu0 0.0
        %307 = vmatprep.subr.mxu0 0.0
        %308 = vmatpush1.msra.mxu0 0.0
        %309 = vmatprep.subr.mxu0 0.0
        %310 = vmatpush1.msra.mxu0 0.0
        %311 = vmatprep.subr.mxu0 0.0
        %312 = vmatpush1.msra.mxu0 0.0
        %313 = vmatprep.subr.mxu0 0.0
        %314 = vmatpush1.msra.mxu0 0.0
        %315 = vmatprep.subr.mxu0 0.0
        %316 = vmatpush1.msra.mxu0 0.0
        %317 = vmatprep.subr.mxu0 0.0
        %318 = vmatpush1.msra.mxu0 0.0
        %319 = vmatprep.subr.mxu0 0.0
        %320 = vmatpush1.msra.mxu0 0.0
        %321 = vmatprep.subr.mxu0 0.0
        %322 = vmatpush1.msra.mxu0 0.0
        %323 = vmatprep.subr.mxu0 0.0
        %324 = vmatpush1.msra.mxu0 0.0
        %325 = vmatprep.subr.mxu0 0.0
        %326 = vmatpush1.msra.mxu0 0.0
        %327 = vmatprep.subr.mxu0 0.0
        %328 = vmatpush1.msra.mxu0 0.0
        %329 = vmatprep.subr.mxu0 0.0
        %330 = vmatpush1.msra.mxu0 0.0
        %331 = vmatprep.subr.mxu0 0.0
        %332 = vmatpush1.msra.mxu0 0.0
        %333 = vmatprep.subr.mxu0 0.0
        %334 = vmatpush1.msra.mxu0 0.0
        %335 = vmatprep.subr.mxu0 0.0
        %336 = vmatpush1.msra.mxu0 0.0
        %337 = vmatprep.subr.mxu0 0.0
        %338 = vmatpush1.msra.mxu0 0.0
        %339 = vmatprep.subr.mxu0 0.0
        %340 = vmatpush1.msra.mxu0 0.0
        %341 = vmatprep.subr.mxu0 0.0
        %342 = vmatpush1.msra.mxu0 0.0
        %343 = vmatprep.subr.mxu0 0.0
        %344 = vmatpush1.msra.mxu0 0.0
        %345 = vmatprep.subr.mxu0 0.0
        %346 = vmatpush1.msra.mxu0 0.0
        %347 = vmatprep.subr.mxu0 0.0
        %348 = vmatpush1.msra.mxu0 0.0
        %349 = vmatprep.subr.mxu0 0.0
        %350 = vmatpush1.msra.mxu0 0.0
        %351 = vmatprep.subr.mxu0 0.0
        %352 = vmatpush1.msra.mxu0 0.0
        %353 = vmatprep.subr.mxu0 0.0
        %354 = vmatpush1.msra.mxu0 0.0
        %355 = vmatprep.subr.mxu0 0.0
        %356 = vmatpush1.msra.mxu0 0.0
        %357 = vmatprep.mubr.f32.mxu0 0.0
        %358 = vmatmul.mubr.f32.gmra.mrb[0].mxu0 %v278
        %v359 = vpop.f32.mrb[0].mxu0
        %v360 = vadd.f32 %v259, %v359
        %v361 = vpop.f32.mrb[0].mxu0
        %362 = vmatprep.mubr.f32.mxu0 0.0
        %363 = vmatmul.mubr.f32.gmra.mrb[0].mxu0 %v281
        %v364 = vpop.f32.mrb[0].mxu0
        %v365 = vadd.f32 %v264, %v364
        %v366 = vpop.f32.mrb[0].mxu0
        %367 = vmatprep.mubr.f32.mxu0 0.0
        %368 = vmatmul.mubr.f32.gmra.mrb[0].mxu0 %v284
        %v369 = vpop.f32.mrb[0].mxu0
        %v370 = vadd.f32 %v269, %v369
        %v371 = vpop.f32.mrb[0].mxu0
        %372 = vmatprep.mubr.f32.mxu0 0.0
        %373 = vmatmul.mubr.f32.gmra.mrb[0].mxu0 %v287
        %v374 = vpop.f32.mrb[0].mxu0
        %v375 = vadd.f32 %v274, %v374
        %v376 = vpop.f32.mrb[0].mxu0
        %377 = vdwg.mxu0
        %v378 = vmax.f32 %v360, 0.0
        %v379 = vmax.f32 %v365, 0.0
        %v380 = vmax.f32 %v370, 0.0
        %v381 = vmax.f32 %v375, 0.0
        %383 = vset.pattern.permute.xlu0 0
        %384 = vperm.xlu0 %383, %v254
        %v385 = vpop.permute.xlu0 %384
        %vm387 = vcmask 261120
        %v389 = vsel %vm387, %v249, 0
        %391 = vmatprep.subr.mxu0 0.0
        %392 = vmatpush1.msra.mxu0 %v378
        %393 = vmatprep.subr.mxu0 0.0
        %394 = vmatpush1.msra.mxu0 %v379
        %395 = vmatprep.subr.mxu0 0.0
        %396 = vmatpush1.msra.mxu0 %v380
        %397 = vmatprep.subr.mxu0 0.0
        %398 = vmatpush1.msra.mxu0 %v381
        %399 = vmatprep.subr.mxu0 0.0
        %400 = vmatpush1.msra.mxu0 0.0
        %401 = vmatprep.subr.mxu0 0.0
        %402 = vmatpush1.msra.mxu0 0.0
        %403 = vmatprep.subr.mxu0 0.0
        %404 = vmatpush1.msra.mxu0 0.0
        %405 = vmatprep.subr.mxu0 0.0
        %406 = vmatpush1.msra.mxu0 0.0
        %407 = vmatprep.subr.mxu0 0.0
        %408 = vmatpush1.msra.mxu0 0.0
        %409 = vmatprep.subr.mxu0 0.0
        %410 = vmatpush1.msra.mxu0 0.0
        %411 = vmatprep.subr.mxu0 0.0
        %412 = vmatpush1.msra.mxu0 0.0
        %413 = vmatprep.subr.mxu0 0.0
        %414 = vmatpush1.msra.mxu0 0.0
        %415 = vmatprep.subr.mxu0 0.0
        %416 = vmatpush1.msra.mxu0 0.0
        %417 = vmatprep.subr.mxu0 0.0
        %418 = vmatpush1.msra.mxu0 0.0
        %419 = vmatprep.subr.mxu0 0.0
        %420 = vmatpush1.msra.mxu0 0.0
        %421 = vmatprep.subr.mxu0 0.0
        %422 = vmatpush1.msra.mxu0 0.0
        %423 = vmatprep.subr.mxu0 0.0
        %424 = vmatpush1.msra.mxu0 0.0
        %425 = vmatprep.subr.mxu0 0.0
        %426 = vmatpush1.msra.mxu0 0.0
        %427 = vmatprep.subr.mxu0 0.0
        %428 = vmatpush1.msra.mxu0 0.0
        %429 = vmatprep.subr.mxu0 0.0
        %430 = vmatpush1.msra.mxu0 0.0
        %431 = vmatprep.subr.mxu0 0.0
        %432 = vmatpush1.msra.mxu0 0.0
        %433 = vmatprep.subr.mxu0 0.0
        %434 = vmatpush1.msra.mxu0 0.0
        %435 = vmatprep.subr.mxu0 0.0
        %436 = vmatpush1.msra.mxu0 0.0
        %437 = vmatprep.subr.mxu0 0.0
        %438 = vmatpush1.msra.mxu0 0.0
        %439 = vmatprep.subr.mxu0 0.0
        %440 = vmatpush1.msra.mxu0 0.0
        %441 = vmatprep.subr.mxu0 0.0
        %442 = vmatpush1.msra.mxu0 0.0
        %443 = vmatprep.subr.mxu0 0.0
        %444 = vmatpush1.msra.mxu0 0.0
        %445 = vmatprep.subr.mxu0 0.0
        %446 = vmatpush1.msra.mxu0 0.0
        %447 = vmatprep.subr.mxu0 0.0
        %448 = vmatpush1.msra.mxu0 0.0
        %449 = vmatprep.subr.mxu0 0.0
        %450 = vmatpush1.msra.mxu0 0.0
        %451 = vmatprep.subr.mxu0 0.0
        %452 = vmatpush1.msra.mxu0 0.0
        %453 = vmatprep.subr.mxu0 0.0
        %454 = vmatpush1.msra.mxu0 0.0
        %455 = vmatprep.mubr.f32.mxu0 0.0
        %456 = vmatmul.mubr.f32.gmra.mrb[0].mxu0 %v389
        %v457 = vpop.f32.mrb[0].mxu0
        %v458 = vadd.f32 %v385, %v457
        %v459 = vpop.f32.mrb[0].mxu0
        %460 = vdwg.mxu0
        %461 = vst [vmem:[%s237] sm:$0xf] %v458
        %s462 = sand.u32 %s153, 1
        %s463 = scalar_lea.sflag [#allocation3], %s462
        %s464 = sand.u32 %s153, 1
        %s465 = smul.addr %s464, 4
        %s466 = scalar_lea.vmem [#allocation2], %s465
        // Predicated region
        $region41: #{tpu_custom_call.1} parent=39 // pred_check
          %p467 = pneg %p163
        $region42: #{tpu_custom_call.1} parent=39 // pred_check_branch
          %469 = sbr.rel (%p467) target = $region44
        $region43: #{tpu_custom_call.1} parent=39 // pred_region
          %s471 = ssub.s32 64, 64
          %472 = vsyncadd %s463, %s471
          %s473 = sadd.s32 %s24, %s23
          %s474 = smul.addr %s473, 64
          %s475 = scalar_lea.hbm %s5, %s474
          %s477 = sshll.u32 %s466, 4
          %s478 = int_to_ptr.vmem [resolvable:$true] %s477
          %480 = dma.vmem_to_hbm [thread:$0]  %s478, 64, %s475, %s463
        $region44: #{tpu_custom_call.1} parent=39 // pred_fallthru
          _
      $region40: #{tpu_custom_call.1} parent=5 // pred_fallthru
        _
      %p481 = scmp.le.s32.totalorder 2, %s14
      // Predicated region
      $region45: #{tpu_custom_call.1} parent=5 // pred_check
        %p482 = pneg %p481
      $region46: #{tpu_custom_call.1} parent=5 // pred_check_branch
        %484 = sbr.rel (%p482) target = $region48
      $region47: #{tpu_custom_call.1} parent=5 // pred_region
        %s485 = ssub.s32 %s14, 2
        // Predicated region
        $region49: #{tpu_custom_call.1} parent=47 // pred_check
          %p486 = pneg %p169
        $region50: #{tpu_custom_call.1} parent=47 // pred_check_branch
          %488 = sbr.rel (%p486) target = $region52
        $region51: #{tpu_custom_call.1} parent=47 // pred_region
          %s489 = sand.u32 %s154, 1
          %s490 = scalar_lea.sflag [#allocation3], %s489
          %s491 = sand.u32 %s154, 1
          %s492 = smul.addr %s491, 4
          %s493 = scalar_lea.vmem [#allocation2], %s492
          %494 = dma.done %s490, 64
        $region52: #{tpu_custom_call.1} parent=47 // pred_fallthru
          _
      $region48: #{tpu_custom_call.1} parent=5 // pred_fallthru
        _
    $region6: #{tpu_custom_call.1} parent=1 // loop_footer
      %s18 = sadd.s32 1, %s14
    $region7: #{tpu_custom_call.1} parent=1 // loop_footer_branch
      %13 = sbr.rel target = $region3
    $region8: #{tpu_custom_call.1} parent=1 // loop_exit
      _
    %495 = vsyncpa [#allocation3], 1
    %s496 = scalar_lea.sflag [#allocation3], 1
    %497 = vsyncpa %s496, 1

</llo_original>
